<compile_context>
chip_gen: v7x
topology: tpu7x:2x2x1
jax: 0.10.0
libtpu: 0.0.40
codegen_flags: <defaults>
</compile_context>

<pallas_src>
import math

import jax
import jax.numpy as jnp
import numpy as np
from jax import lax
from jax.experimental import pallas as pl
from jax.experimental.pallas import tpu as pltpu


def _round_up(x, m):
    return (x + m - 1) // m * m


def _pad_axis(x, axis, target):
    pad = target - x.shape[axis]
    if pad == 0:
        return x
    widths = [(0, 0)] * x.ndim
    widths[axis] = (0, pad)
    return jnp.pad(x, widths)


def _make_attn_kernel(scale, return_weights):
    def kernel(valid_lens_ref, q_ref, k_ref, v_ref, out_ref, *maybe_w):
        b = pl.program_id(0)
        # Fold 1/sqrt(d) into q (TQ x D multiply, D << K in real attention shapes).
        q = q_ref[0].astype(jnp.float32) * scale          # (TQ, Dp)
        k = k_ref[0]                                       # (Kp, Dp)
        v = v_ref[0]                                       # (Kp, Dvp)

        # scores = q @ k^T expressed as a transposed-RHS contraction -> no XLU transpose.
        scores = lax.dot_general(
            q, k,
            dimension_numbers=(((1,), (1,)), ((), ())),
            preferred_element_type=jnp.float32)            # (TQ, Kp)

        # masked_softmax: col >= valid_len -> -1e6 (matches the PyTorch reference).
        # Padded key columns (col >= K >= valid_len) are masked by the same compare.
        vl = valid_lens_ref[b]
        col = lax.broadcasted_iota(jnp.int32, scores.shape, 1)
        scores = jnp.where(col < vl, scores, jnp.float32(-1000000.0))

        m = jnp.max(scores, axis=-1, keepdims=True)
        e = jnp.exp(scores - m)
        denom = jnp.sum(e, axis=-1, keepdims=True)
        # approx=True would use the (idle) EUP vrcp slot but does not meet the 1e-5 check;
        # keep the exact reciprocal.
        w = e * pl.reciprocal(denom, approx=False)         # (TQ, Kp)

        # dropout(p=0) is identity -> output = weights @ values
        out_ref[0] = lax.dot_general(
            w.astype(v.dtype), v,
            dimension_numbers=(((1,), (0,)), ((), ())),
            preferred_element_type=jnp.float32).astype(out_ref.dtype)

        if return_weights:
            maybe_w[0][0] = w.astype(maybe_w[0].dtype)

    return kernel


def dot_product_attention(queries, keys, values, valid_lens, *,
                          return_weights=False, tq=256):
    """queries (B,Q,D), keys (B,K,D), values (B,K,Dv), valid_lens (B,) int32.

    Returns output (B,Q,Dv); if return_weights, also the attention weights (B,Q,K)."""
    B, Q, D = queries.shape
    _, K, _ = keys.shape
    Dv = values.shape[-1]
    scale = 1.0 / math.sqrt(D)  # scale uses the *original* feature dim

    # Lane-dense padding: last dims to 128 multiples, Q tile a multiple of 8 (f32 sublane).
    Dp = _round_up(D, 128)
    Dvp = _round_up(Dv, 128)
    Kp = _round_up(K, 128)
    TQ = min(tq, _round_up(Q, 8))
    Qp = _round_up(Q, TQ)

    qp = _pad_axis(_pad_axis(queries, 2, Dp), 1, Qp)
    kp = _pad_axis(_pad_axis(keys, 2, Dp), 1, Kp)
    vp = _pad_axis(_pad_axis(values, 2, Dvp), 1, Kp)
    vl = valid_lens.astype(jnp.int32)

    grid = (B, Qp // TQ)

    in_specs = [
        pl.BlockSpec((1, TQ, Dp), lambda b, qi, vl_ref: (b, qi, 0)),
        pl.BlockSpec((1, Kp, Dp), lambda b, qi, vl_ref: (b, 0, 0)),
        pl.BlockSpec((1, Kp, Dvp), lambda b, qi, vl_ref: (b, 0, 0)),
    ]
    out_shapes = [jax.ShapeDtypeStruct((B, Qp, Dvp), queries.dtype)]
    out_specs = [pl.BlockSpec((1, TQ, Dvp), lambda b, qi, vl_ref: (b, qi, 0))]
    if return_weights:
        out_shapes.append(jax.ShapeDtypeStruct((B, Qp, Kp), jnp.float32))
        out_specs.append(pl.BlockSpec((1, TQ, Kp), lambda b, qi, vl_ref: (b, qi, 0)))

    grid_spec = pltpu.PrefetchScalarGridSpec(
        num_scalar_prefetch=1,  # valid_lens -> SMEM, read by scalar index in the kernel
        grid=grid,
        in_specs=in_specs,
        out_specs=out_specs,
    )

    results = pl.pallas_call(
        _make_attn_kernel(scale, return_weights),
        out_shape=tuple(out_shapes),
        grid_spec=grid_spec,
        compiler_params=pltpu.CompilerParams(
            dimension_semantics=("parallel", "parallel")),
    )(vl, qp, kp, vp)

    out = results[0][:, :Q, :Dv]
    if return_weights:
        return out, results[1][:, :Q, :K]
    return out


def _reference(queries, keys, values, valid_lens):
    d = queries.shape[-1]
    scores = jnp.einsum("bqd,bkd->bqk", queries, keys) / math.sqrt(d)
    col = jnp.arange(scores.shape[-1], dtype=jnp.float32)[None, None, :]
    mask = col < valid_lens.astype(jnp.float32)[:, None, None]
    scores = jnp.where(mask, scores, -1000000.0)
    w = jax.nn.softmax(scores, axis=-1)
    return jnp.einsum("bqk,bkv->bqv", w, values), w


if __name__ == "__main__":
    B, Q, K, D, Dv = 2, 8, 8, 32, 32
    key = jax.random.PRNGKey(0)
    kq, kk, kv = jax.random.split(key, 3)
    queries = jax.random.normal(kq, (B, Q, D), dtype=jnp.float32)
    keys = jax.random.normal(kk, (B, K, D), dtype=jnp.float32)
    values = jax.random.normal(kv, (B, K, Dv), dtype=jnp.float32)
    valid_lens = jnp.array([3, 6], dtype=jnp.int32)

    out, weights = dot_product_attention(queries, keys, values, valid_lens,
                                         return_weights=True)
    out = jax.block_until_ready(out)
    weights = jax.block_until_ready(weights)

    ref_out, ref_w = _reference(queries, keys, values, valid_lens)
    np.testing.assert_allclose(np.asarray(out), np.asarray(ref_out), rtol=1e-5, atol=1e-5)
    np.testing.assert_allclose(np.asarray(weights), np.asarray(ref_w), rtol=1e-5, atol=1e-5)

    # Fast path: no attention-weights writeback (halves HBM write traffic for long K).
    out_only = jax.block_until_ready(
        dot_product_attention(queries, keys, values, valid_lens))
    np.testing.assert_allclose(np.asarray(out_only), np.asarray(ref_out),
                               rtol=1e-5, atol=1e-5)

    print("KERNEL_OK")
</pallas_src>

<mosaic_0001>
module attributes {stable_mosaic.version = 11 : i64} {
  func.func @kernel(%arg0: i32, %arg1: i32, %arg2: memref<2xi32, #tpu.memory_space<smem>>, %arg3: memref<1x8x128xf32, #tpu.memory_space<vmem>>, %arg4: memref<1x128x128xf32, #tpu.memory_space<vmem>>, %arg5: memref<1x128x128xf32, #tpu.memory_space<vmem>>, %arg6: memref<1x8x128xf32, #tpu.memory_space<vmem>>, %arg7: memref<1x8x128xf32, #tpu.memory_space<vmem>>) attributes {dimension_semantics = [#tpu.dimension_semantics<parallel>, #tpu.dimension_semantics<parallel>], iteration_bounds = array<i64: 2, 1>, scalar_prefetch = 1 : i64, scratch_operands = 0 : i64, tpu.core_type = #tpu.core_type<tc>, window_params = [{transform_indices = @transform_0, window_bounds = array<i64: 1, 8, 128>}, {transform_indices = @transform_1, window_bounds = array<i64: 1, 128, 128>}, {transform_indices = @transform_2, window_bounds = array<i64: 1, 128, 128>}, {transform_indices = @transform_3, window_bounds = array<i64: 1, 8, 128>}, {transform_indices = @transform_4, window_bounds = array<i64: 1, 8, 128>}]} {
    %c0 = arith.constant 0 : index
    %c0_0 = arith.constant 0 : index
    %c0_1 = arith.constant 0 : index
    %0 = vector.load %arg3[%c0, %c0_0, %c0_1] : memref<1x8x128xf32, #tpu.memory_space<vmem>>, vector<1x8x128xf32>
    %1 = vector.shape_cast %0 : vector<1x8x128xf32> to vector<8x128xf32>
    %cst = arith.constant 0.176776692 : f32
    %2 = vector.broadcast %cst : f32 to vector<8x128xf32>
    %3 = arith.mulf %1, %2 : vector<8x128xf32>
    %c0_2 = arith.constant 0 : index
    %c0_3 = arith.constant 0 : index
    %c0_4 = arith.constant 0 : index
    %4 = vector.load %arg4[%c0_2, %c0_3, %c0_4] : memref<1x128x128xf32, #tpu.memory_space<vmem>>, vector<1x128x128xf32>
    %5 = vector.shape_cast %4 : vector<1x128x128xf32> to vector<128x128xf32>
    %c0_5 = arith.constant 0 : index
    %c0_6 = arith.constant 0 : index
    %c0_7 = arith.constant 0 : index
    %6 = vector.load %arg5[%c0_5, %c0_6, %c0_7] : memref<1x128x128xf32, #tpu.memory_space<vmem>>, vector<1x128x128xf32>
    %7 = vector.shape_cast %6 : vector<1x128x128xf32> to vector<128x128xf32>
    %cst_8 = arith.constant dense<0.000000e+00> : vector<8x128xf32>
    %8 = tpu.matmul %3, %5, %cst_8 {dimension_numbers = #tpu.dot_dimension_numbers<[1], [1], [0], [0], [0, 0, 1, 0], [], []>} : vector<8x128xf32>, vector<128x128xf32>, vector<8x128xf32> -> vector<8x128xf32>
    %9 = arith.index_cast %arg0 : i32 to index
    %10 = memref.load %arg2[%9] : memref<2xi32, #tpu.memory_space<smem>>
    %11 = tpu.iota {dimensions = array<i32: 1>} : vector<8x128xi32>
    %12 = vector.broadcast %10 : i32 to vector<8x128xi32>
    %13 = arith.cmpi slt, %11, %12 : vector<8x128xi32>
    %cst_9 = arith.constant -1.000000e+06 : f32
    %14 = vector.broadcast %cst_9 : f32 to vector<8x128xf32>
    %15 = arith.select %13, %8, %14 : vector<8x128xi1>, vector<8x128xf32>
    %cst_10 = arith.constant dense<0xFF800000> : vector<8xf32>
    %16 = vector.multi_reduction <maximumf>, %15, %cst_10 [1] : vector<8x128xf32> to vector<8xf32>
    %17 = vector.shape_cast %16 : vector<8xf32> to vector<8x1xf32>
    %18 = vector.broadcast %17 : vector<8x1xf32> to vector<8x128xf32>
    %19 = arith.subf %15, %18 : vector<8x128xf32>
    %20 = math.exp %19 : vector<8x128xf32>
    %cst_11 = arith.constant dense<0.000000e+00> : vector<8xf32>
    %21 = vector.multi_reduction <add>, %20, %cst_11 [1] : vector<8x128xf32> to vector<8xf32>
    %22 = vector.shape_cast %21 : vector<8xf32> to vector<8x1xf32>
    %23 = tpu.reciprocal %22 : vector<8x1xf32> -> vector<8x1xf32>
    %24 = vector.broadcast %23 : vector<8x1xf32> to vector<8x128xf32>
    %25 = arith.mulf %20, %24 : vector<8x128xf32>
    %cst_12 = arith.constant dense<0.000000e+00> : vector<8x128xf32>
    %26 = tpu.matmul %25, %7, %cst_12 {dimension_numbers = #tpu.dot_dimension_numbers<[1], [0], [0], [1], [0, 0, 1, 1], [], []>} : vector<8x128xf32>, vector<128x128xf32>, vector<8x128xf32> -> vector<8x128xf32>
    %c0_13 = arith.constant 0 : index
    %c0_14 = arith.constant 0 : index
    %c0_15 = arith.constant 0 : index
    %27 = vector.load %arg6[%c0_13, %c0_14, %c0_15] : memref<1x8x128xf32, #tpu.memory_space<vmem>>, vector<1x8x128xf32>
    %28 = vector.shape_cast %27 : vector<1x8x128xf32> to vector<8x128xf32>
    %29 = vector.shape_cast %26 : vector<8x128xf32> to vector<1x8x128xf32>
    tpu.vector_store %arg6[%c0_13, %c0_14, %c0_15], %29 {strides = array<i32>} : memref<1x8x128xf32, #tpu.memory_space<vmem>>, vector<1x8x128xf32>,
    %c0_16 = arith.constant 0 : index
    %c0_17 = arith.constant 0 : index
    %c0_18 = arith.constant 0 : index
    %30 = vector.load %arg7[%c0_16, %c0_17, %c0_18] : memref<1x8x128xf32, #tpu.memory_space<vmem>>, vector<1x8x128xf32>
    %31 = vector.shape_cast %30 : vector<1x8x128xf32> to vector<8x128xf32>
    %32 = vector.shape_cast %25 : vector<8x128xf32> to vector<1x8x128xf32>
    tpu.vector_store %arg7[%c0_16, %c0_17, %c0_18], %32 {strides = array<i32>} : memref<1x8x128xf32, #tpu.memory_space<vmem>>, vector<1x8x128xf32>,
    return
  }
  func.func @transform_0(%arg0: i32, %arg1: i32, %arg2: memref<2xi32, #tpu.memory_space<smem>>) -> (i32, i32, i32) {
    %c0_i32 = arith.constant 0 : i32
    %c0_i32_0 = arith.constant 0 : i32
    return %arg0, %arg1, %c0_i32 : i32, i32, i32
  }
  func.func @transform_1(%arg0: i32, %arg1: i32, %arg2: memref<2xi32, #tpu.memory_space<smem>>) -> (i32, i32, i32) {
    %c0_i32 = arith.constant 0 : i32
    %c0_i32_0 = arith.constant 0 : i32
    %c0_i32_1 = arith.constant 0 : i32
    return %arg0, %c0_i32, %c0_i32_0 : i32, i32, i32
  }
  func.func @transform_2(%arg0: i32, %arg1: i32, %arg2: memref<2xi32, #tpu.memory_space<smem>>) -> (i32, i32, i32) {
    %c0_i32 = arith.constant 0 : i32
    %c0_i32_0 = arith.constant 0 : i32
    %c0_i32_1 = arith.constant 0 : i32
    return %arg0, %c0_i32, %c0_i32_0 : i32, i32, i32
  }
  func.func @transform_3(%arg0: i32, %arg1: i32, %arg2: memref<2xi32, #tpu.memory_space<smem>>) -> (i32, i32, i32) {
    %c0_i32 = arith.constant 0 : i32
    %c0_i32_0 = arith.constant 0 : i32
    return %arg0, %arg1, %c0_i32 : i32, i32, i32
  }
  func.func @transform_4(%arg0: i32, %arg1: i32, %arg2: memref<2xi32, #tpu.memory_space<smem>>) -> (i32, i32, i32) {
    %c0_i32 = arith.constant 0 : i32
    %c0_i32_0 = arith.constant 0 : i32
    return %arg0, %arg1, %c0_i32 : i32, i32, i32
  }
}

</mosaic_0001>

<llo_original>
// kernel: tpu_custom_call.1
$region0: #{tpu_custom_call.1}
  #allocation0 [shape = 'u32[]', space=smem, size = 0x4, offset = 0x4, fixed_abs, tag = 'smem constant byte address 0x4 - core index']
  #allocation1 [shape = 'u32[144,128]{1,0:T(1,128)}', space=vmem, size = 0x12000, scoped, tag = 'internal scratch']
  #allocation2 [shape = 's32[1]{0}', space=sflag, size = 0x4, scoped, tag = 'scoped memory for tpu_custom_call.1']
  #allocation3 [shape = 'u8[512]{0}', space=smem, size = 0x200, scoped, tag = 'prefetched SMEM operand 0']
  %s0 = inlined_call_operand.hbm [shape: s32[2], index: 0, kind: input, shape index: {}]
  %s1 = inlined_call_operand.hbm [shape: f32[2,8,128], index: 1, kind: input, shape index: {}]
  %s2 = inlined_call_operand.hbm [shape: f32[2,128,128], index: 2, kind: input, shape index: {}]
  %s3 = inlined_call_operand.hbm [shape: f32[2,128,128], index: 3, kind: input, shape index: {}]
  %s4 = inlined_call_operand.hbm [shape: f32[2,8,128], index: 4, kind: output, shape index: {0}]
  %s5 = inlined_call_operand.hbm [shape: f32[2,8,128], index: 5, kind: output, shape index: {1}]
  %6 = xla_tuple %s4, %s5
  %s7 = sld [smem:[#allocation0]]
  $region65: #{tpu_custom_call.1} parent=0
    _
  %s9 = ssub.s32 1, %s7
  %s10 = scalar_select 0, %s9, %s7
  %12 = dma.hbm_to_smem %s0, 16, [#allocation3], [#allocation2]
  %13 = dma.done [#allocation2], 16
  %14 = sfence
  $region1: #{tpu_custom_call.1} parent=0
    #allocation4 [shape = 'u8[8192]{0}', space=vmem, size = 0x2000, scoped, tag = 'input window, operand 1']
    #allocation5 [shape = 's32[2]{0}', space=sflag, size = 0x8, scoped, tag = 'scoped memory for tpu_custom_call.1']
    #allocation6 [shape = 's32[2]{0}', space=sflag, size = 0x8, scoped, tag = 'scoped memory for tpu_custom_call.1']
    #allocation7 [shape = 'u8[131072]{0}', space=vmem, size = 0x20000, scoped, tag = 'input window, operand 2']
    #allocation8 [shape = 's32[2]{0}', space=sflag, size = 0x8, scoped, tag = 'scoped memory for tpu_custom_call.1']
    #allocation9 [shape = 'u8[131072]{0}', space=vmem, size = 0x20000, scoped, tag = 'input window, operand 3']
    #allocation10 [shape = 'u8[8192]{0}', space=vmem, size = 0x2000, scoped, tag = 'output window, operand 0']
    #allocation11 [shape = 'u8[8192]{0}', space=vmem, size = 0x2000, scoped, tag = 'output window, operand 1']
    #allocation12 [shape = 's32[2]{0}', space=sflag, size = 0x8, scoped, tag = 'scoped memory for tpu_custom_call.1']
    %15 = vsyncpa [#allocation5], 0
    %s16 = scalar_lea.sflag [#allocation5], 1
    %17 = vsyncpa %s16, 0
    %18 = vsyncpa [#allocation8], 0
    %s19 = scalar_lea.sflag [#allocation8], 1
    %20 = vsyncpa %s19, 0
    %21 = vsyncpa [#allocation6], 0
    %s22 = scalar_lea.sflag [#allocation6], 1
    %23 = vsyncpa %s22, 0
    %24 = vsyncpa [#allocation12], 0
    %s25 = scalar_lea.sflag [#allocation12], 1
    %26 = vsyncpa %s25, 0
    loop: start=0, step=1, limit=4
    $region2: #{tpu_custom_call.1} parent=1 // loop_pre_header
      _
    $region3: #{tpu_custom_call.1} parent=1 // loop_header
      %s28 = sphi 0, %s32
      %p29 = scmp.ge.s32.totalorder %s28, 4
      %s35 = sphi 0, %s47
      %s36 = sphi 0, %s43
      %s37 = sphi 0, %s35
      %s38 = sphi 0, %s36
      %s39 = sphi 0, %s37
      %s40 = sphi 0, %s38
      %s52 = sphi 0, %s54
      %s55 = sphi 0, %s52
      %s56 = sphi 0, %s55
      %s72 = sphi 0, %s56
      %s78 = sphi 0, %s80
      %s81 = sphi 0, %s78
      %s82 = sphi 0, %s81
      %s98 = sphi 0, %s82
      %s104 = sphi 0, %s106
      %s107 = sphi 0, %s104
      %s108 = sphi 0, %s107
      %s124 = sphi 0, %s108
      %s132 = sphi 0, %s134
      %s135 = sphi 0, %s132
      %s136 = sphi 0, %s135
      %s152 = sphi 0, %s136
      %s160 = sphi 0, %s162
      %s163 = sphi 0, %s160
      %s164 = sphi 0, %s163
      %s180 = sphi 0, %s164
    $region4: #{tpu_custom_call.1} parent=1 // loop_header_branch
      %31 = sbr.rel (%p29) target = $region8
    $region5: #{tpu_custom_call.1} parent=1 // loop_body
      %s33 = ssub.s32 %s28, 1
      %s34 = ssub.s32 %s28, 2
      %s41 = sadd.s32 1, %s36
      %p42 = scmp.ge.s32.totalorder %s41, 1
      %s43 = scalar_select %p42, 0, %s41
      %s44 = sadd.s32 1, %s35
      %s45 = scalar_select %p42, %s44, %s35
      %p46 = scmp.ge.s32.totalorder %s45, 2
      %s47 = scalar_select %p46, 0, %s45
      %s48 = ssub.s32 %s35, %s47
      %s49 = ssub.s32 %s36, %s43
      %s50 = sor.u32 %s48, %s49
      %p51 = scmp.eq.s32.totalorder %s50, 0
      %s53 = sadd.s32 %s52, 1
      %s54 = scalar_select %p51, %s52, %s53
      %p57 = pneg %p51
      %p58 = scmp.eq.s32.totalorder %s28, 1
      %p59 = por %p57, %p58
      %p60 = scmp.ne.s32.totalorder %s52, %s55
      %p61 = scmp.eq.s32.totalorder %s28, 0
      %p62 = por %p60, %p61
      %p63 = scmp.ne.s32.totalorder %s52, %s55
      %p64 = scmp.eq.s32.totalorder %s33, 1
      %p65 = por %p63, %p64
      %p66 = scmp.ne.s32.totalorder %s55, %s56
      %p67 = scmp.eq.s32.totalorder %s33, 0
      %p68 = por %p66, %p67
      %p69 = scmp.ne.s32.totalorder %s55, %s56
      %p70 = scmp.eq.s32.totalorder %s34, 1
      %p71 = por %p69, %p70
      %p73 = scmp.ne.s32.totalorder %s56, %s72
      %p74 = scmp.eq.s32.totalorder %s34, 0
      %p75 = por %p73, %p74
      %s76 = ssub.s32 %s35, %s47
      %p77 = scmp.eq.s32.totalorder %s76, 0
      %s79 = sadd.s32 %s78, 1
      %s80 = scalar_select %p77, %s78, %s79
      %p83 = pneg %p77
      %p84 = scmp.eq.s32.totalorder %s28, 1
      %p85 = por %p83, %p84
      %p86 = scmp.ne.s32.totalorder %s78, %s81
      %p87 = scmp.eq.s32.totalorder %s28, 0
      %p88 = por %p86, %p87
      %p89 = scmp.ne.s32.totalorder %s78, %s81
      %p90 = scmp.eq.s32.totalorder %s33, 1
      %p91 = por %p89, %p90
      %p92 = scmp.ne.s32.totalorder %s81, %s82
      %p93 = scmp.eq.s32.totalorder %s33, 0
      %p94 = por %p92, %p93
      %p95 = scmp.ne.s32.totalorder %s81, %s82
      %p96 = scmp.eq.s32.totalorder %s34, 1
      %p97 = por %p95, %p96
      %p99 = scmp.ne.s32.totalorder %s82, %s98
      %p100 = scmp.eq.s32.totalorder %s34, 0
      %p101 = por %p99, %p100
      %s102 = ssub.s32 %s35, %s47
      %p103 = scmp.eq.s32.totalorder %s102, 0
      %s105 = sadd.s32 %s104, 1
      %s106 = scalar_select %p103, %s104, %s105
      %p109 = pneg %p103
      %p110 = scmp.eq.s32.totalorder %s28, 1
      %p111 = por %p109, %p110
      %p112 = scmp.ne.s32.totalorder %s104, %s107
      %p113 = scmp.eq.s32.totalorder %s28, 0
      %p114 = por %p112, %p113
      %p115 = scmp.ne.s32.totalorder %s104, %s107
      %p116 = scmp.eq.s32.totalorder %s33, 1
      %p117 = por %p115, %p116
      %p118 = scmp.ne.s32.totalorder %s107, %s108
      %p119 = scmp.eq.s32.totalorder %s33, 0
      %p120 = por %p118, %p119
      %p121 = scmp.ne.s32.totalorder %s107, %s108
      %p122 = scmp.eq.s32.totalorder %s34, 1
      %p123 = por %p121, %p122
      %p125 = scmp.ne.s32.totalorder %s108, %s124
      %p126 = scmp.eq.s32.totalorder %s34, 0
      %p127 = por %p125, %p126
      %s128 = ssub.s32 %s35, %s47
      %s129 = ssub.s32 %s36, %s43
      %s130 = sor.u32 %s128, %s129
      %p131 = scmp.eq.s32.totalorder %s130, 0
      %s133 = sadd.s32 %s132, 1
      %s134 = scalar_select %p131, %s132, %s133
      %p137 = pneg %p131
      %p138 = scmp.eq.s32.totalorder %s28, 1
      %p139 = por %p137, %p138
      %p140 = scmp.ne.s32.totalorder %s132, %s135
      %p141 = scmp.eq.s32.totalorder %s28, 0
      %p142 = por %p140, %p141
      %p143 = scmp.ne.s32.totalorder %s132, %s135
      %p144 = scmp.eq.s32.totalorder %s33, 1
      %p145 = por %p143, %p144
      %p146 = scmp.ne.s32.totalorder %s135, %s136
      %p147 = scmp.eq.s32.totalorder %s33, 0
      %p148 = por %p146, %p147
      %p149 = scmp.ne.s32.totalorder %s135, %s136
      %p150 = scmp.eq.s32.totalorder %s34, 1
      %p151 = por %p149, %p150
      %p153 = scmp.ne.s32.totalorder %s136, %s152
      %p154 = scmp.eq.s32.totalorder %s34, 0
      %p155 = por %p153, %p154
      %s156 = ssub.s32 %s35, %s47
      %s157 = ssub.s32 %s36, %s43
      %s158 = sor.u32 %s156, %s157
      %p159 = scmp.eq.s32.totalorder %s158, 0
      %s161 = sadd.s32 %s160, 1
      %s162 = scalar_select %p159, %s160, %s161
      %p165 = pneg %p159
      %p166 = scmp.eq.s32.totalorder %s28, 1
      %p167 = por %p165, %p166
      %p168 = scmp.ne.s32.totalorder %s160, %s163
      %p169 = scmp.eq.s32.totalorder %s28, 0
      %p170 = por %p168, %p169
      %p171 = scmp.ne.s32.totalorder %s160, %s163
      %p172 = scmp.eq.s32.totalorder %s33, 1
      %p173 = por %p171, %p172
      %p174 = scmp.ne.s32.totalorder %s163, %s164
      %p175 = scmp.eq.s32.totalorder %s33, 0
      %p176 = por %p174, %p175
      %p177 = scmp.ne.s32.totalorder %s163, %s164
      %p178 = scmp.eq.s32.totalorder %s34, 1
      %p179 = por %p177, %p178
      %p181 = scmp.ne.s32.totalorder %s164, %s180
      %p182 = scmp.eq.s32.totalorder %s34, 0
      %p183 = por %p181, %p182
      %p184 = scmp.le.s32.totalorder 1, %s28
      %p185 = scmp.lt.s32.totalorder %s28, 3
      %p186 = pnand %p184, %p185
      %p187 = pneg %p186
      // Predicated region
      $region9: #{tpu_custom_call.1} parent=5 // pred_check
        _
      $region10: #{tpu_custom_call.1} parent=5 // pred_check_branch
        %189 = sbr.rel (%p186) target = $region12
      $region11: #{tpu_custom_call.1} parent=5 // pred_region
        %s190 = ssub.s32 %s28, 1
      $region12: #{tpu_custom_call.1} parent=5 // pred_fallthru
        _
      %p191 = scmp.lt.s32.totalorder %s28, 2
      // Predicated region
      $region13: #{tpu_custom_call.1} parent=5 // pred_check
        %p192 = pneg %p191
      $region14: #{tpu_custom_call.1} parent=5 // pred_check_branch
        %194 = sbr.rel (%p192) target = $region16
      $region15: #{tpu_custom_call.1} parent=5 // pred_region
        // Predicated region
        $region17: #{tpu_custom_call.1} parent=15 // pred_check
          %p195 = pneg %p62
        $region18: #{tpu_custom_call.1} parent=15 // pred_check_branch
          %197 = sbr.rel (%p195) target = $region20
        $region19: #{tpu_custom_call.1} parent=15 // pred_region
          %s198 = sand.u32 %s52, 1
          %s199 = scalar_lea.sflag [#allocation5], %s198
          %s200 = sand.u32 %s52, 1
          %s201 = smul.addr %s200, 8
          %s202 = scalar_lea.vmem [#allocation4], %s201
          %s204 = ssub.s32 128, 128
          %205 = vsyncadd %s199, %s204
          %s206 = sadd.s32 %s36, %s35
          %s207 = smul.addr %s206, 128
          %s208 = scalar_lea.hbm %s1, %s207
          %s210 = sshll.u32 %s202, 4
          %s211 = int_to_ptr.vmem [resolvable:$true] %s210
          %213 = dma.hbm_to_vmem [thread:$0]  %s208, 128, %s211, %s199
        $region20: #{tpu_custom_call.1} parent=15 // pred_fallthru
          _
        // Predicated region
        $region21: #{tpu_custom_call.1} parent=15 // pred_check
          %p214 = pneg %p88
        $region22: #{tpu_custom_call.1} parent=15 // pred_check_branch
          %216 = sbr.rel (%p214) target = $region24
        $region23: #{tpu_custom_call.1} parent=15 // pred_region
          %s217 = sand.u32 %s28, 1
          %s218 = scalar_lea.sflag [#allocation8], %s217
          %s219 = sand.u32 %s78, 1
          %s220 = smul.addr %s219, 128
          %s221 = scalar_lea.vmem [#allocation7], %s220
          %s223 = ssub.s32 2048, 2048
          %224 = vsyncadd %s218, %s223
          %s225 = smul.addr %s35, 16
          %s226 = smul.addr %s225, 128
          %s227 = scalar_lea.hbm %s2, %s226
          %s228 = sshll.u32 %s221, 4
          %s229 = int_to_ptr.vmem [resolvable:$true] %s228
          %234 = dma.hbm_to_vmem [thread:$0]  %s227, 2048, %s229, %s218, 128, 128, 8
        $region24: #{tpu_custom_call.1} parent=15 // pred_fallthru
          _
        // Predicated region
        $region25: #{tpu_custom_call.1} parent=15 // pred_check
          %p235 = pneg %p114
        $region26: #{tpu_custom_call.1} parent=15 // pred_check_branch
          %237 = sbr.rel (%p235) target = $region28
        $region27: #{tpu_custom_call.1} parent=15 // pred_region
          %s238 = sand.u32 %s28, 1
          %s239 = scalar_lea.sflag [#allocation8], %s238
          %s240 = sand.u32 %s104, 1
          %s241 = smul.addr %s240, 128
          %s242 = scalar_lea.vmem [#allocation9], %s241
          %s244 = ssub.s32 2048, 2048
          %245 = vsyncadd %s239, %s244
          %s246 = smul.addr %s35, 16
          %s247 = smul.addr %s246, 128
          %s248 = scalar_lea.hbm %s3, %s247
          %s249 = sshll.u32 %s242, 4
          %s250 = int_to_ptr.vmem [resolvable:$true] %s249
          %255 = dma.hbm_to_vmem [thread:$0]  %s248, 2048, %s250, %s239, 128, 128, 8
        $region28: #{tpu_custom_call.1} parent=15 // pred_fallthru
          _
      $region16: #{tpu_custom_call.1} parent=5 // pred_fallthru
        _
      %p256 = scmp.le.s32.totalorder 1, %s28
      %p257 = scmp.lt.s32.totalorder %s28, 3
      %p258 = pnand %p256, %p257
      %p259 = pneg %p258
      // Predicated region
      $region29: #{tpu_custom_call.1} parent=5 // pred_check
        _
      $region30: #{tpu_custom_call.1} parent=5 // pred_check_branch
        %261 = sbr.rel (%p258) target = $region32
      $region31: #{tpu_custom_call.1} parent=5 // pred_region
        %s262 = ssub.s32 %s28, 1
        %s263 = sand.u32 %s55, 1
        %s264 = scalar_lea.sflag [#allocation5], %s263
        %s265 = sand.u32 %s55, 1
        %s266 = smul.addr %s265, 8
        %s267 = scalar_lea.vmem [#allocation4], %s266
        // Predicated region
        $region33: #{tpu_custom_call.1} parent=31 // pred_check
          %p268 = pneg %p68
        $region34: #{tpu_custom_call.1} parent=31 // pred_check_branch
          %270 = sbr.rel (%p268) target = $region36
        $region35: #{tpu_custom_call.1} parent=31 // pred_region
          %271 = dma.done %s264, 128
        $region36: #{tpu_custom_call.1} parent=31 // pred_fallthru
          _
        %s272 = sand.u32 %s33, 1
        %s273 = scalar_lea.sflag [#allocation8], %s272
        %s274 = sand.u32 %s81, 1
        %s275 = smul.addr %s274, 128
        %s276 = scalar_lea.vmem [#allocation7], %s275
        // Predicated region
        $region37: #{tpu_custom_call.1} parent=31 // pred_check
          %p277 = pneg %p94
        $region38: #{tpu_custom_call.1} parent=31 // pred_check_branch
          %279 = sbr.rel (%p277) target = $region40
        $region39: #{tpu_custom_call.1} parent=31 // pred_region
          %280 = dma.done %s273, 2048
        $region40: #{tpu_custom_call.1} parent=31 // pred_fallthru
          _
        %s281 = sand.u32 %s33, 1
        %s282 = scalar_lea.sflag [#allocation8], %s281
        %s283 = sand.u32 %s107, 1
        %s284 = smul.addr %s283, 128
        %s285 = scalar_lea.vmem [#allocation9], %s284
        // Predicated region
        $region41: #{tpu_custom_call.1} parent=31 // pred_check
          %p286 = pneg %p120
        $region42: #{tpu_custom_call.1} parent=31 // pred_check_branch
          %288 = sbr.rel (%p286) target = $region44
        $region43: #{tpu_custom_call.1} parent=31 // pred_region
          %289 = dma.done %s282, 2048
        $region44: #{tpu_custom_call.1} parent=31 // pred_fallthru
          _
        %s290 = sand.u32 %s55, 1
        %s291 = scalar_lea.sflag [#allocation5], %s290
        %s292 = sand.u32 %s55, 1
        %s293 = smul.addr %s292, 8
        %s294 = scalar_lea.vmem [#allocation4], %s293
        %p295 = pneg %p68
        %p296 = pneg %p65
        %s297 = sand.u32 %s33, 1
        %s298 = scalar_lea.sflag [#allocation8], %s297
        %s299 = sand.u32 %s81, 1
        %s300 = smul.addr %s299, 128
        %s301 = scalar_lea.vmem [#allocation7], %s300
        %p302 = pneg %p94
        %p303 = pneg %p91
        %s304 = sand.u32 %s33, 1
        %s305 = scalar_lea.sflag [#allocation8], %s304
        %s306 = sand.u32 %s107, 1
        %s307 = smul.addr %s306, 128
        %s308 = scalar_lea.vmem [#allocation9], %s307
        %p309 = pneg %p120
        %p310 = pneg %p117
        %p311 = pneg %p148
        %p312 = pneg %p145
        %s313 = sand.u32 %s135, 1
        %s314 = scalar_lea.sflag [#allocation6], %s313
        %s315 = sand.u32 %s135, 1
        %s316 = smul.addr %s315, 8
        %s317 = scalar_lea.vmem [#allocation10], %s316
        %p318 = pneg %p176
        %p319 = pneg %p173
        %s320 = sand.u32 %s163, 1
        %s321 = scalar_lea.sflag [#allocation12], %s320
        %s322 = sand.u32 %s163, 1
        %s323 = smul.addr %s322, 8
        %s324 = scalar_lea.vmem [#allocation11], %s323
        %v325 = vld [vmem:[%s267] sm:$0xff]
        %v326 = vmul.f32 %v325, 0.17677669
        %v327 = vld [vmem:[%s276] sm:$0xff]
        %v328 = vld [vmem:[%s276 + $0x8] sm:$0xff]
        %v329 = vld [vmem:[%s276 + $0x10] sm:$0xff]
        %v330 = vld [vmem:[%s276 + $0x18] sm:$0xff]
        %v331 = vld [vmem:[%s276 + $0x20] sm:$0xff]
        %v332 = vld [vmem:[%s276 + $0x28] sm:$0xff]
        %v333 = vld [vmem:[%s276 + $0x30] sm:$0xff]
        %v334 = vld [vmem:[%s276 + $0x38] sm:$0xff]
        %v335 = vld [vmem:[%s276 + $0x40] sm:$0xff]
        %v336 = vld [vmem:[%s276 + $0x48] sm:$0xff]
        %v337 = vld [vmem:[%s276 + $0x50] sm:$0xff]
        %v338 = vld [vmem:[%s276 + $0x58] sm:$0xff]
        %v339 = vld [vmem:[%s276 + $0x60] sm:$0xff]
        %v340 = vld [vmem:[%s276 + $0x68] sm:$0xff]
        %v341 = vld [vmem:[%s276 + $0x70] sm:$0xff]
        %v342 = vld [vmem:[%s276 + $0x78] sm:$0xff]
        %v343 = vld [vmem:[%s285] sm:$0xff]
        %v344 = vld [vmem:[%s285 + $0x8] sm:$0xff]
        %v345 = vld [vmem:[%s285 + $0x10] sm:$0xff]
        %v346 = vld [vmem:[%s285 + $0x18] sm:$0xff]
        %v347 = vld [vmem:[%s285 + $0x20] sm:$0xff]
        %v348 = vld [vmem:[%s285 + $0x28] sm:$0xff]
        %v349 = vld [vmem:[%s285 + $0x30] sm:$0xff]
        %v350 = vld [vmem:[%s285 + $0x38] sm:$0xff]
        %v351 = vld [vmem:[%s285 + $0x40] sm:$0xff]
        %v352 = vld [vmem:[%s285 + $0x48] sm:$0xff]
        %v353 = vld [vmem:[%s285 + $0x50] sm:$0xff]
        %v354 = vld [vmem:[%s285 + $0x58] sm:$0xff]
        %v355 = vld [vmem:[%s285 + $0x60] sm:$0xff]
        %v356 = vld [vmem:[%s285 + $0x68] sm:$0xff]
        %v357 = vld [vmem:[%s285 + $0x70] sm:$0xff]
        %v358 = vld [vmem:[%s285 + $0x78] sm:$0xff]
        %359 = vmatprep.subr.mxu0 0.0
        %360 = vmatpush1.xpose.msra.mxu0 %v327
        %361 = vmatprep.subr.mxu0 0.0
        %362 = vmatpush1.xpose.msra.mxu0 %v328
        %363 = vmatprep.subr.mxu0 0.0
        %364 = vmatpush1.xpose.msra.mxu0 %v329
        %365 = vmatprep.subr.mxu0 0.0
        %366 = vmatpush1.xpose.msra.mxu0 %v330
        %367 = vmatprep.subr.mxu0 0.0
        %368 = vmatpush1.xpose.msra.mxu0 %v331
        %369 = vmatprep.subr.mxu0 0.0
        %370 = vmatpush1.xpose.msra.mxu0 %v332
        %371 = vmatprep.subr.mxu0 0.0
        %372 = vmatpush1.xpose.msra.mxu0 %v333
        %373 = vmatprep.subr.mxu0 0.0
        %374 = vmatpush1.xpose.msra.mxu0 %v334
        %375 = vmatprep.subr.mxu0 0.0
        %376 = vmatpush1.xpose.msra.mxu0 %v335
        %377 = vmatprep.subr.mxu0 0.0
        %378 = vmatpush1.xpose.msra.mxu0 %v336
        %379 = vmatprep.subr.mxu0 0.0
        %380 = vmatpush1.xpose.msra.mxu0 %v337
        %381 = vmatprep.subr.mxu0 0.0
        %382 = vmatpush1.xpose.msra.mxu0 %v338
        %383 = vmatprep.subr.mxu0 0.0
        %384 = vmatpush1.xpose.msra.mxu0 %v339
        %385 = vmatprep.subr.mxu0 0.0
        %386 = vmatpush1.xpose.msra.mxu0 %v340
        %387 = vmatprep.subr.mxu0 0.0
        %388 = vmatpush1.xpose.msra.mxu0 %v341
        %389 = vmatprep.subr.mxu0 0.0
        %390 = vmatpush1.xpose.msra.mxu0 %v342
        %391 = vmatprep.subr.mxu0 0.0
        %392 = vmatpush1.xpose.msra.mxu0 0.0
        %393 = vmatprep.subr.mxu0 0.0
        %394 = vmatpush1.xpose.msra.mxu0 0.0
        %395 = vmatprep.subr.mxu0 0.0
        %396 = vmatpush1.xpose.msra.mxu0 0.0
        %397 = vmatprep.subr.mxu0 0.0
        %398 = vmatpush1.xpose.msra.mxu0 0.0
        %399 = vmatprep.subr.mxu0 0.0
        %400 = vmatpush1.xpose.msra.mxu0 0.0
        %401 = vmatprep.subr.mxu0 0.0
        %402 = vmatpush1.xpose.msra.mxu0 0.0
        %403 = vmatprep.subr.mxu0 0.0
        %404 = vmatpush1.xpose.msra.mxu0 0.0
        %405 = vmatprep.subr.mxu0 0.0
        %406 = vmatpush1.xpose.msra.mxu0 0.0
        %407 = vmatprep.subr.mxu0 0.0
        %408 = vmatpush1.xpose.msra.mxu0 0.0
        %409 = vmatprep.subr.mxu0 0.0
        %410 = vmatpush1.xpose.msra.mxu0 0.0
        %411 = vmatprep.subr.mxu0 0.0
        %412 = vmatpush1.xpose.msra.mxu0 0.0
        %413 = vmatprep.subr.mxu0 0.0
        %414 = vmatpush1.xpose.msra.mxu0 0.0
        %415 = vmatprep.subr.mxu0 0.0
        %416 = vmatpush1.xpose.msra.mxu0 0.0
        %417 = vmatprep.subr.mxu0 0.0
        %418 = vmatpush1.xpose.msra.mxu0 0.0
        %419 = vmatprep.subr.mxu0 0.0
        %420 = vmatpush1.xpose.msra.mxu0 0.0
        %421 = vmatprep.subr.mxu0 0.0
        %422 = vmatpush1.xpose.msra.mxu0 0.0
        %423 = vmatprep.mubr.f32.mxu0 0.0
        %424 = vmatmul.mubr.f32.gmra.mrb[0].mxu0 %v326
        %v425 = vpop.f32.mrb[0].mxu0
        %v426 = vadd.f32 0.0, %v425
        %v427 = vpop.f32.mrb[0].mxu0
        %428 = vdwg.mxu0
        %s429 = sld [smem:[#allocation3 + %s37]]
        %v430 = vlaneseq
        %v431 = vand.u32 %v430, 127
        %v432 = vstv %s429
        %vm433 = vcmp.lt.s32.totalorder %v431, %v432
        %v434 = vsel %vm433, %v426, -1000000.0
        %435 = vmax.xlane.f32.xlu0 %v434
        %v436 = vpop.xlane.xlu0 %435
        %v437 = vsub.f32 %v434, %v436
        %v438 = vmul.f32 %v437, 1.442695
        %v439 = vpow.pop %v438
        %440 = vadd.xlane.f32.xlu0 %v439
        %v441 = vpop.xlane.xlu0 %440
        %v442 = vrcp.pop %v441
        %v443 = vmul.f32 %v439, %v442
        %444 = vmatprep.subr.mxu0 0.0
        %445 = vmatpush1.msra.mxu0 %v343
        %446 = vmatprep.subr.mxu0 0.0
        %447 = vmatpush1.msra.mxu0 %v344
        %448 = vmatprep.subr.mxu0 0.0
        %449 = vmatpush1.msra.mxu0 %v345
        %450 = vmatprep.subr.mxu0 0.0
        %451 = vmatpush1.msra.mxu0 %v346
        %452 = vmatprep.subr.mxu0 0.0
        %453 = vmatpush1.msra.mxu0 %v347
        %454 = vmatprep.subr.mxu0 0.0
        %455 = vmatpush1.msra.mxu0 %v348
        %456 = vmatprep.subr.mxu0 0.0
        %457 = vmatpush1.msra.mxu0 %v349
        %458 = vmatprep.subr.mxu0 0.0
        %459 = vmatpush1.msra.mxu0 %v350
        %460 = vmatprep.subr.mxu0 0.0
        %461 = vmatpush1.msra.mxu0 %v351
        %462 = vmatprep.subr.mxu0 0.0
        %463 = vmatpush1.msra.mxu0 %v352
        %464 = vmatprep.subr.mxu0 0.0
        %465 = vmatpush1.msra.mxu0 %v353
        %466 = vmatprep.subr.mxu0 0.0
        %467 = vmatpush1.msra.mxu0 %v354
        %468 = vmatprep.subr.mxu0 0.0
        %469 = vmatpush1.msra.mxu0 %v355
        %470 = vmatprep.subr.mxu0 0.0
        %471 = vmatpush1.msra.mxu0 %v356
        %472 = vmatprep.subr.mxu0 0.0
        %473 = vmatpush1.msra.mxu0 %v357
        %474 = vmatprep.subr.mxu0 0.0
        %475 = vmatpush1.msra.mxu0 %v358
        %476 = vmatprep.subr.mxu0 0.0
        %477 = vmatpush1.msra.mxu0 0.0
        %478 = vmatprep.subr.mxu0 0.0
        %479 = vmatpush1.msra.mxu0 0.0
        %480 = vmatprep.subr.mxu0 0.0
        %481 = vmatpush1.msra.mxu0 0.0
        %482 = vmatprep.subr.mxu0 0.0
        %483 = vmatpush1.msra.mxu0 0.0
        %484 = vmatprep.subr.mxu0 0.0
        %485 = vmatpush1.msra.mxu0 0.0
        %486 = vmatprep.subr.mxu0 0.0
        %487 = vmatpush1.msra.mxu0 0.0
        %488 = vmatprep.subr.mxu0 0.0
        %489 = vmatpush1.msra.mxu0 0.0
        %490 = vmatprep.subr.mxu0 0.0
        %491 = vmatpush1.msra.mxu0 0.0
        %492 = vmatprep.subr.mxu0 0.0
        %493 = vmatpush1.msra.mxu0 0.0
        %494 = vmatprep.subr.mxu0 0.0
        %495 = vmatpush1.msra.mxu0 0.0
        %496 = vmatprep.subr.mxu0 0.0
        %497 = vmatpush1.msra.mxu0 0.0
        %498 = vmatprep.subr.mxu0 0.0
        %499 = vmatpush1.msra.mxu0 0.0
        %500 = vmatprep.subr.mxu0 0.0
        %501 = vmatpush1.msra.mxu0 0.0
        %502 = vmatprep.subr.mxu0 0.0
        %503 = vmatpush1.msra.mxu0 0.0
        %504 = vmatprep.subr.mxu0 0.0
        %505 = vmatpush1.msra.mxu0 0.0
        %506 = vmatprep.subr.mxu0 0.0
        %507 = vmatpush1.msra.mxu0 0.0
        %508 = vmatprep.mubr.f32.mxu0 0.0
        %509 = vmatmul.mubr.f32.gmra.mrb[0].mxu0 %v443
        %v510 = vpop.f32.mrb[0].mxu0
        %v511 = vadd.f32 0.0, %v510
        %v512 = vpop.f32.mrb[0].mxu0
        %513 = vdwg.mxu0
        %514 = vst [vmem:[%s317] sm:$0xff] %v511
        %515 = vst [vmem:[%s324] sm:$0xff] %v443
        %s516 = sand.u32 %s135, 1
        %s517 = scalar_lea.sflag [#allocation6], %s516
        %s518 = sand.u32 %s135, 1
        %s519 = smul.addr %s518, 8
        %s520 = scalar_lea.vmem [#allocation10], %s519
        %s521 = sand.u32 %s163, 1
        %s522 = scalar_lea.sflag [#allocation12], %s521
        %s523 = sand.u32 %s163, 1
        %s524 = smul.addr %s523, 8
        %s525 = scalar_lea.vmem [#allocation11], %s524
        // Predicated region
        $region45: #{tpu_custom_call.1} parent=31 // pred_check
          %p526 = pneg %p145
        $region46: #{tpu_custom_call.1} parent=31 // pred_check_branch
          %528 = sbr.rel (%p526) target = $region48
        $region47: #{tpu_custom_call.1} parent=31 // pred_region
          %s530 = ssub.s32 128, 128
          %531 = vsyncadd %s517, %s530
          %s532 = sadd.s32 %s38, %s37
          %s533 = smul.addr %s532, 128
          %s534 = scalar_lea.hbm %s4, %s533
          %s536 = sshll.u32 %s520, 4
          %s537 = int_to_ptr.vmem [resolvable:$true] %s536
          %539 = dma.vmem_to_hbm [thread:$0]  %s537, 128, %s534, %s517
        $region48: #{tpu_custom_call.1} parent=31 // pred_fallthru
          _
        // Predicated region
        $region49: #{tpu_custom_call.1} parent=31 // pred_check
          %p540 = pneg %p173
        $region50: #{tpu_custom_call.1} parent=31 // pred_check_branch
          %542 = sbr.rel (%p540) target = $region52
        $region51: #{tpu_custom_call.1} parent=31 // pred_region
          %s544 = ssub.s32 128, 128
          %545 = vsyncadd %s522, %s544
          %s546 = sadd.s32 %s38, %s37
          %s547 = smul.addr %s546, 128
          %s548 = scalar_lea.hbm %s5, %s547
          %s550 = sshll.u32 %s525, 4
          %s551 = int_to_ptr.vmem [resolvable:$true] %s550
          %553 = dma.vmem_to_hbm [thread:$0]  %s551, 128, %s548, %s522
        $region52: #{tpu_custom_call.1} parent=31 // pred_fallthru
          _
      $region32: #{tpu_custom_call.1} parent=5 // pred_fallthru
        _
      %p554 = scmp.le.s32.totalorder 2, %s28
      // Predicated region
      $region53: #{tpu_custom_call.1} parent=5 // pred_check
        %p555 = pneg %p554
      $region54: #{tpu_custom_call.1} parent=5 // pred_check_branch
        %557 = sbr.rel (%p555) target = $region56
      $region55: #{tpu_custom_call.1} parent=5 // pred_region
        %s558 = ssub.s32 %s28, 2
        // Predicated region
        $region57: #{tpu_custom_call.1} parent=55 // pred_check
          %p559 = pneg %p151
        $region58: #{tpu_custom_call.1} parent=55 // pred_check_branch
          %561 = sbr.rel (%p559) target = $region60
        $region59: #{tpu_custom_call.1} parent=55 // pred_region
          %s562 = sand.u32 %s136, 1
          %s563 = scalar_lea.sflag [#allocation6], %s562
          %s564 = sand.u32 %s136, 1
          %s565 = smul.addr %s564, 8
          %s566 = scalar_lea.vmem [#allocation10], %s565
          %567 = dma.done %s563, 128
        $region60: #{tpu_custom_call.1} parent=55 // pred_fallthru
          _
        // Predicated region
        $region61: #{tpu_custom_call.1} parent=55 // pred_check
          %p568 = pneg %p179
        $region62: #{tpu_custom_call.1} parent=55 // pred_check_branch
          %570 = sbr.rel (%p568) target = $region64
        $region63: #{tpu_custom_call.1} parent=55 // pred_region
          %s571 = sand.u32 %s164, 1
          %s572 = scalar_lea.sflag [#allocation12], %s571
          %s573 = sand.u32 %s164, 1
          %s574 = smul.addr %s573, 8
          %s575 = scalar_lea.vmem [#allocation11], %s574
          %576 = dma.done %s572, 128
        $region64: #{tpu_custom_call.1} parent=55 // pred_fallthru
          _
      $region56: #{tpu_custom_call.1} parent=5 // pred_fallthru
        _
    $region6: #{tpu_custom_call.1} parent=1 // loop_footer
      %s32 = sadd.s32 1, %s28
    $region7: #{tpu_custom_call.1} parent=1 // loop_footer_branch
      %27 = sbr.rel target = $region3
    $region8: #{tpu_custom_call.1} parent=1 // loop_exit
      _
    %577 = vsyncpa [#allocation5], 1
    %s578 = scalar_lea.sflag [#allocation5], 1
    %579 = vsyncpa %s578, 1
    %580 = vsyncpa [#allocation8], 1
    %s581 = scalar_lea.sflag [#allocation8], 1
    %582 = vsyncpa %s581, 1
    %583 = vsyncpa [#allocation6], 1
    %s584 = scalar_lea.sflag [#allocation6], 1
    %585 = vsyncpa %s584, 1
    %586 = vsyncpa [#allocation12], 1
    %s587 = scalar_lea.sflag [#allocation12], 1
    %588 = vsyncpa %s587, 1

</llo_original>
